<compile_context>
chip_gen: v7x
topology: tpu7x:2x2x1
jax: 0.10.0
libtpu: 0.0.40
codegen_flags: <defaults>
</compile_context>

<pallas_src>
import functools

import jax
import jax.numpy as jnp
from jax.experimental import pallas as pl
from jax.experimental.pallas import tpu as pltpu


# ----------------------------------------------------------------------------
# Helpers
# ----------------------------------------------------------------------------
def _round_up(x: int, m: int) -> int:
    return (x + m - 1) // m * m


def _choose_batch_tile(batch: int, max_tile: int = 1024) -> tuple[int, int]:
    """Pick (batch_tile, n_blocks): tiles <= max_tile rows, padding <= 7 rows,
    and an even block count when multiple blocks are needed (so v7x's two
    TensorCores both get batch blocks; ~free on 1-TC v5e/v6e)."""
    n_blocks = max(1, -(-batch // max_tile))
    if n_blocks > 1 and n_blocks % 2 == 1:
        n_blocks += 1
    tb = _round_up(-(-batch // n_blocks), 8)
    return tb, n_blocks


# ----------------------------------------------------------------------------
# Parameter packing (done ONCE, outside the jitted forward)
# ----------------------------------------------------------------------------
def pack_qnet_params(params):
    """Pack per-layer (W:(in,out), b:(1,out)) into padded operands.

    Returns:
      w0:      (in_pad, d_max) f32   first-layer weight, in_pad = round_up(state_dim, 8)
      w_rest:  (n_layers-1, d_max, d_max) f32, or None if only one layer
      b_pack:  (n_layers, 1, d_max) f32
    d_max is the max layer output width rounded up to 128 lanes.  All padding
    is exact zeros, so valid output lanes are bit-identical to the reference.
    """
    n_layers = len(params)
    state_dim = params[0][0].shape[0]
    in_pad = _round_up(state_dim, 8)
    d_max = _round_up(max(w.shape[1] for w, _ in params), 128)

    w0 = jnp.zeros((in_pad, d_max), jnp.float32)
    w0 = w0.at[:state_dim, : params[0][0].shape[1]].set(params[0][0].astype(jnp.float32))

    b_pack = jnp.zeros((n_layers, 1, d_max), jnp.float32)
    for l, (_, b) in enumerate(params):
        b_pack = b_pack.at[l, 0, : b.size].set(b.reshape(-1).astype(jnp.float32))

    if n_layers > 1:
        w_rest = jnp.zeros((n_layers - 1, d_max, d_max), jnp.float32)
        for l, (w, _) in enumerate(params[1:]):
            w_rest = w_rest.at[l, : w.shape[0], : w.shape[1]].set(w.astype(jnp.float32))
    else:
        w_rest = None
    return w0, w_rest, b_pack


# ----------------------------------------------------------------------------
# Kernel
# ----------------------------------------------------------------------------
def _make_qnet_kernel(n_layers: int, action_dim: int):
    """Fused MLP + greedy-argmax epilogue.

    Refs (in order): x (tb, in_pad), w0 (in_pad, D), [w_rest (n_layers-1, D, D)],
                     b (n_layers, 1, D), q_out (tb, action_dim), act_out (tb, 1).
    ReLU after every layer except the last; zero padding keeps padded lanes at
    exactly zero through every dot / bias / ReLU.
    """

    def kernel(*refs):
        if n_layers > 1:
            x_ref, w0_ref, wr_ref, b_ref, q_ref, act_ref = refs
        else:
            x_ref, w0_ref, b_ref, q_ref, act_ref = refs

        # Layer 0: narrow-K matmul (K = in_pad, e.g. 16) against the resident weights.
        h = jnp.dot(x_ref[...], w0_ref[...],
                    preferred_element_type=jnp.float32) + b_ref[0]
        for l in range(1, n_layers):                       # static Python unroll
            h = jnp.maximum(h, 0.0)                        # ReLU on the f32 VPU path
            h = jnp.dot(h, wr_ref[l - 1],
                        preferred_element_type=jnp.float32) + b_ref[l]

        q = h[:, :action_dim]                              # valid Q lanes only
        q_ref[...] = q.astype(q_ref.dtype)                 # narrow store (~32x less writeback)

        # Fused greedy-action epilogue (first-max-index, matches torch argmax).
        row_max = jnp.max(q, axis=-1, keepdims=True)
        lane_id = jax.lax.broadcasted_iota(jnp.int32, q.shape, 1)
        act = jnp.min(jnp.where(q == row_max, lane_id, action_dim),
                      axis=-1, keepdims=True)
        act_ref[...] = act.astype(act_ref.dtype)

    return kernel


# ----------------------------------------------------------------------------
# Forward wrapper (jit this; packing already done outside)
# ----------------------------------------------------------------------------
def qnet_apply(state, w0, w_rest, b_pack, *, action_dim: int, max_tile: int = 1024):
    """Returns (q_values (batch, action_dim) f32, greedy_action (batch, 1) int32)."""
    batch, state_dim = state.shape
    in_pad, d_max = w0.shape
    n_layers = b_pack.shape[0]

    tb, n_blocks = _choose_batch_tile(batch, max_tile)
    batch_pad = tb * n_blocks

    x = state.astype(jnp.float32)
    if batch_pad != batch or in_pad != state_dim:
        x = jnp.pad(x, ((0, batch_pad - batch), (0, in_pad - state_dim)))

    operands = [x, w0]
    in_specs = [
        pl.BlockSpec((tb, in_pad), lambda i: (i, 0)),          # batch-tiled input
        pl.BlockSpec((in_pad, d_max), lambda i: (0, 0)),       # resident first-layer W
    ]
    if n_layers > 1:
        operands.append(w_rest)
        in_specs.append(pl.BlockSpec((n_layers - 1, d_max, d_max), lambda i: (0, 0, 0)))
    operands.append(b_pack)
    in_specs.append(pl.BlockSpec((n_layers, 1, d_max), lambda i: (0, 0, 0)))

    q_pad, act_pad = pl.pallas_call(
        _make_qnet_kernel(n_layers, action_dim),
        out_shape=(
            jax.ShapeDtypeStruct((batch_pad, action_dim), jnp.float32),
            jax.ShapeDtypeStruct((batch_pad, 1), jnp.int32),
        ),
        grid=(n_blocks,),
        in_specs=in_specs,
        out_specs=(
            pl.BlockSpec((tb, action_dim), lambda i: (i, 0)),
            pl.BlockSpec((tb, 1), lambda i: (i, 0)),
        ),
        compiler_params=pltpu.CompilerParams(
            dimension_semantics=("parallel",),   # batch blocks split across TCs on v7x
        ),
    )(*operands)

    if batch_pad != batch:
        q_pad = q_pad[:batch]
        act_pad = act_pad[:batch]
    return q_pad, act_pad


def qnet_forward(state, w0, w_rest, b_pack, *, action_dim: int, max_tile: int = 1024):
    """QNet.forward: state (batch, state_dim) -> Q-values (batch, action_dim)."""
    return qnet_apply(state, w0, w_rest, b_pack,
                      action_dim=action_dim, max_tile=max_tile)[0]


# ----------------------------------------------------------------------------
# Deterministic parameter init (PyTorch nn.Linear default: U(-1/sqrt(in), +1/sqrt(in)))
# Weights stored pre-transposed as (in_dim, out_dim) so y = x @ W + b matches
# PyTorch's y = x @ W.T + b with W:(out, in).
# ----------------------------------------------------------------------------
def init_qnet_params(key, state_dim, hidden_dims, action_dim):
    dims = [state_dim, *hidden_dims, action_dim]
    params = []
    for in_dim, out_dim in zip(dims[:-1], dims[1:]):
        key, kw, kb = jax.random.split(key, 3)
        bound = 1.0 / (in_dim ** 0.5)
        w = jax.random.uniform(kw, (in_dim, out_dim), jnp.float32, -bound, bound)
        b = jax.random.uniform(kb, (1, out_dim), jnp.float32, -bound, bound)
        params.append((w, b))
    return params


# Pure-JAX reference for correctness checking.
def qnet_forward_ref(state, params):
    h = state.astype(jnp.float32)
    for i, (w, b) in enumerate(params):
        h = h @ w + b
        if i < len(params) - 1:
            h = jnp.maximum(h, 0.0)
    return h


# ----------------------------------------------------------------------------
# Main
# ----------------------------------------------------------------------------
if __name__ == "__main__":
    key = jax.random.PRNGKey(0)

    batch = 8
    state_dim = 16
    hidden_dims = (32, 32)   # `dims` argument of QNet
    action_dim = 4

    k_params, k_state = jax.random.split(key)
    params = init_qnet_params(k_params, state_dim, hidden_dims, action_dim)
    state = jax.random.normal(k_state, (batch, state_dim), jnp.float32)

    # Pack / pad weights ONCE (agent-init time), outside the jitted forward.
    w0_p, wr_p, b_p = pack_qnet_params(params)
    w0_p, wr_p, b_p = jax.block_until_ready((w0_p, wr_p, b_p))

    fwd = jax.jit(functools.partial(qnet_apply, action_dim=action_dim))
    q_values, greedy_action = jax.block_until_ready(fwd(state, w0_p, wr_p, b_p))

    q_ref = qnet_forward_ref(state, params)
    assert q_values.shape == (batch, action_dim)
    assert greedy_action.shape == (batch, 1)
    assert jnp.allclose(q_values, q_ref, atol=1e-5, rtol=1e-5), "Q mismatch vs JAX reference"
    assert jnp.array_equal(greedy_action[:, 0], jnp.argmax(q_ref, axis=1)), "argmax mismatch"

    # TODO(synk): QNet.get_action()'s epsilon-greedy *random* branch uses host-side
    # RNG (torch.rand / torch.randint); only the deterministic forward + greedy
    # argmax are implemented as the kernel.  The epsilon mix stays in plain JAX.

    print("KERNEL_OK")
</pallas_src>

<mosaic_0001>
module attributes {stable_mosaic.version = 11 : i64} {
  func.func @kernel(%arg0: i32, %arg1: memref<8x16xf32, #tpu.memory_space<vmem>>, %arg2: memref<16x128xf32, #tpu.memory_space<vmem>>, %arg3: memref<2x128x128xf32, #tpu.memory_space<vmem>>, %arg4: memref<3x1x128xf32, #tpu.memory_space<vmem>>, %arg5: memref<8x4xf32, #tpu.memory_space<vmem>>, %arg6: memref<8x1xi32, #tpu.memory_space<vmem>>) attributes {dimension_semantics = [#tpu.dimension_semantics<parallel>], iteration_bounds = array<i64: 1>, scalar_prefetch = 0 : i64, scratch_operands = 0 : i64, tpu.core_type = #tpu.core_type<tc>, window_params = [{transform_indices = @transform_0, window_bounds = array<i64: 8, 16>}, {pipeline_mode = #tpu.pipeline_mode<synchronous>, transform_indices = @transform_1, window_bounds = array<i64: 16, 128>}, {pipeline_mode = #tpu.pipeline_mode<synchronous>, transform_indices = @transform_2, window_bounds = array<i64: 2, 128, 128>}, {pipeline_mode = #tpu.pipeline_mode<synchronous>, transform_indices = @transform_3, window_bounds = array<i64: 3, 1, 128>}, {transform_indices = @transform_4, window_bounds = array<i64: 8, 4>}, {transform_indices = @transform_5, window_bounds = array<i64: 8, 1>}]} {
    %c0 = arith.constant 0 : index
    %c0_0 = arith.constant 0 : index
    %0 = vector.load %arg1[%c0, %c0_0] : memref<8x16xf32, #tpu.memory_space<vmem>>, vector<8x16xf32>
    %c0_1 = arith.constant 0 : index
    %c0_2 = arith.constant 0 : index
    %1 = vector.load %arg2[%c0_1, %c0_2] : memref<16x128xf32, #tpu.memory_space<vmem>>, vector<16x128xf32>
    %cst = arith.constant dense<0.000000e+00> : vector<8x128xf32>
    %2 = tpu.matmul %0, %1, %cst {dimension_numbers = #tpu.dot_dimension_numbers<[1], [0], [0], [1], [0, 0, 1, 1], [], []>} : vector<8x16xf32>, vector<16x128xf32>, vector<8x128xf32> -> vector<8x128xf32>
    %c0_3 = arith.constant 0 : index
    %c0_4 = arith.constant 0 : index
    %c0_5 = arith.constant 0 : index
    %3 = vector.load %arg4[%c0_3, %c0_4, %c0_5] : memref<3x1x128xf32, #tpu.memory_space<vmem>>, vector<1x1x128xf32>
    %4 = vector.shape_cast %3 : vector<1x1x128xf32> to vector<1x128xf32>
    %5 = vector.broadcast %4 : vector<1x128xf32> to vector<8x128xf32>
    %6 = arith.addf %2, %5 : vector<8x128xf32>
    %cst_6 = arith.constant 0.000000e+00 : f32
    %7 = vector.broadcast %cst_6 : f32 to vector<8x128xf32>
    %8 = arith.maximumf %6, %7 : vector<8x128xf32>
    %c0_7 = arith.constant 0 : index
    %c0_8 = arith.constant 0 : index
    %c0_9 = arith.constant 0 : index
    %9 = vector.load %arg3[%c0_7, %c0_8, %c0_9] : memref<2x128x128xf32, #tpu.memory_space<vmem>>, vector<1x128x128xf32>
    %10 = vector.shape_cast %9 : vector<1x128x128xf32> to vector<128x128xf32>
    %cst_10 = arith.constant dense<0.000000e+00> : vector<8x128xf32>
    %11 = tpu.matmul %8, %10, %cst_10 {dimension_numbers = #tpu.dot_dimension_numbers<[1], [0], [0], [1], [0, 0, 1, 1], [], []>} : vector<8x128xf32>, vector<128x128xf32>, vector<8x128xf32> -> vector<8x128xf32>
    %c1 = arith.constant 1 : index
    %c0_11 = arith.constant 0 : index
    %c0_12 = arith.constant 0 : index
    %12 = vector.load %arg4[%c1, %c0_11, %c0_12] : memref<3x1x128xf32, #tpu.memory_space<vmem>>, vector<1x1x128xf32>
    %13 = vector.shape_cast %12 : vector<1x1x128xf32> to vector<1x128xf32>
    %14 = vector.broadcast %13 : vector<1x128xf32> to vector<8x128xf32>
    %15 = arith.addf %11, %14 : vector<8x128xf32>
    %cst_13 = arith.constant 0.000000e+00 : f32
    %16 = vector.broadcast %cst_13 : f32 to vector<8x128xf32>
    %17 = arith.maximumf %15, %16 : vector<8x128xf32>
    %c1_14 = arith.constant 1 : index
    %c0_15 = arith.constant 0 : index
    %c0_16 = arith.constant 0 : index
    %18 = vector.load %arg3[%c1_14, %c0_15, %c0_16] : memref<2x128x128xf32, #tpu.memory_space<vmem>>, vector<1x128x128xf32>
    %19 = vector.shape_cast %18 : vector<1x128x128xf32> to vector<128x128xf32>
    %cst_17 = arith.constant dense<0.000000e+00> : vector<8x128xf32>
    %20 = tpu.matmul %17, %19, %cst_17 {dimension_numbers = #tpu.dot_dimension_numbers<[1], [0], [0], [1], [0, 0, 1, 1], [], []>} : vector<8x128xf32>, vector<128x128xf32>, vector<8x128xf32> -> vector<8x128xf32>
    %c2 = arith.constant 2 : index
    %c0_18 = arith.constant 0 : index
    %c0_19 = arith.constant 0 : index
    %21 = vector.load %arg4[%c2, %c0_18, %c0_19] : memref<3x1x128xf32, #tpu.memory_space<vmem>>, vector<1x1x128xf32>
    %22 = vector.shape_cast %21 : vector<1x1x128xf32> to vector<1x128xf32>
    %23 = vector.broadcast %22 : vector<1x128xf32> to vector<8x128xf32>
    %24 = arith.addf %20, %23 : vector<8x128xf32>
    %25 = vector.extract_strided_slice %24 {offsets = [0, 0], sizes = [8, 4], strides = [1, 1]} : vector<8x128xf32> to vector<8x4xf32>
    %c0_20 = arith.constant 0 : index
    %c0_21 = arith.constant 0 : index
    %26 = vector.load %arg5[%c0_20, %c0_21] : memref<8x4xf32, #tpu.memory_space<vmem>>, vector<8x4xf32>
    tpu.vector_store %arg5[%c0_20, %c0_21], %25 {strides = array<i32>} : memref<8x4xf32, #tpu.memory_space<vmem>>, vector<8x4xf32>,
    %cst_22 = arith.constant dense<0xFF800000> : vector<8xf32>
    %27 = vector.multi_reduction <maximumf>, %25, %cst_22 [1] : vector<8x4xf32> to vector<8xf32>
    %28 = vector.shape_cast %27 : vector<8xf32> to vector<8x1xf32>
    %29 = tpu.iota {dimensions = array<i32: 1>} : vector<8x4xi32>
    %30 = vector.broadcast %28 : vector<8x1xf32> to vector<8x4xf32>
    %31 = arith.cmpf oeq, %25, %30 : vector<8x4xf32>
    %c4_i32 = arith.constant 4 : i32
    %32 = vector.broadcast %c4_i32 : i32 to vector<8x4xi32>
    %33 = arith.select %31, %29, %32 : vector<8x4xi1>, vector<8x4xi32>
    %cst_23 = arith.constant dense<2147483647> : vector<8xi32>
    %34 = vector.multi_reduction <minsi>, %33, %cst_23 [1] : vector<8x4xi32> to vector<8xi32>
    %35 = vector.shape_cast %34 : vector<8xi32> to vector<8x1xi32>
    %c0_24 = arith.constant 0 : index
    %c0_25 = arith.constant 0 : index
    %36 = vector.load %arg6[%c0_24, %c0_25] : memref<8x1xi32, #tpu.memory_space<vmem>>, vector<8x1xi32>
    tpu.vector_store %arg6[%c0_24, %c0_25], %35 {strides = array<i32>} : memref<8x1xi32, #tpu.memory_space<vmem>>, vector<8x1xi32>,
    return
  }
  func.func @transform_0(%arg0: i32) -> (i32, i32) {
    %c0_i32 = arith.constant 0 : i32
    %c0_i32_0 = arith.constant 0 : i32
    return %arg0, %c0_i32 : i32, i32
  }
  func.func @transform_1(%arg0: i32) -> (i32, i32) {
    %c0_i32 = arith.constant 0 : i32
    %c0_i32_0 = arith.constant 0 : i32
    %c0_i32_1 = arith.constant 0 : i32
    return %c0_i32, %c0_i32_0 : i32, i32
  }
  func.func @transform_2(%arg0: i32) -> (i32, i32, i32) {
    %c0_i32 = arith.constant 0 : i32
    %c0_i32_0 = arith.constant 0 : i32
    %c0_i32_1 = arith.constant 0 : i32
    %c0_i32_2 = arith.constant 0 : i32
    return %c0_i32, %c0_i32_0, %c0_i32_1 : i32, i32, i32
  }
  func.func @transform_3(%arg0: i32) -> (i32, i32, i32) {
    %c0_i32 = arith.constant 0 : i32
    %c0_i32_0 = arith.constant 0 : i32
    %c0_i32_1 = arith.constant 0 : i32
    %c0_i32_2 = arith.constant 0 : i32
    return %c0_i32, %c0_i32_0, %c0_i32_1 : i32, i32, i32
  }
  func.func @transform_4(%arg0: i32) -> (i32, i32) {
    %c0_i32 = arith.constant 0 : i32
    %c0_i32_0 = arith.constant 0 : i32
    return %arg0, %c0_i32 : i32, i32
  }
  func.func @transform_5(%arg0: i32) -> (i32, i32) {
    %c0_i32 = arith.constant 0 : i32
    %c0_i32_0 = arith.constant 0 : i32
    return %arg0, %c0_i32 : i32, i32
  }
}

</mosaic_0001>

<llo_original>
// kernel: qnet_apply.1
$region0: #{qnet_apply.1}
  #allocation0 [shape = 'u32[]', space=smem, size = 0x4, offset = 0x4, fixed_abs, tag = 'smem constant byte address 0x4 - core index']
  #allocation1 [shape = 'u32[144,128]{1,0:T(1,128)}', space=vmem, size = 0x12000, scoped, tag = 'internal scratch']
  %s0 = inlined_call_operand.hbm [shape: f32[8,16], index: 0, kind: input, shape index: {}]
  %s1 = inlined_call_operand.hbm [shape: f32[16,128], index: 1, kind: input, shape index: {}]
  %s2 = inlined_call_operand.hbm [shape: f32[2,128,128], index: 2, kind: input, shape index: {}]
  %s3 = inlined_call_operand.vmem [shape: f32[3,1,128], index: 3, kind: input, shape index: {}]
  %s4 = inlined_call_operand.vmem [shape: f32[8,4], index: 4, kind: output, shape index: {0}]
  %s5 = inlined_call_operand.vmem [shape: s32[8,1], index: 5, kind: output, shape index: {1}]
  %6 = xla_tuple %s4, %s5
  %s7 = sld [smem:[#allocation0]]
  $region46: #{qnet_apply.1} parent=0
    _
  %s9 = ssub.s32 1, %s7
  %s10 = scalar_select 0, %s9, %s7
  $region1: #{qnet_apply.1} parent=0
    #allocation2 [shape = 'u8[4096]{0}', space=vmem, size = 0x1000, scoped, tag = 'input window, operand 0, single buffered']
    #allocation3 [shape = 's32[1]{0}', space=sflag, size = 0x4, scoped, tag = 'scoped memory for qnet_apply.1']
    #allocation4 [shape = 'u8[8192]{0}', space=vmem, size = 0x2000, scoped, tag = 'input window, operand 1, single buffered']
    #allocation5 [shape = 's32[1]{0}', space=sflag, size = 0x4, scoped, tag = 'scoped memory for qnet_apply.1']
    #allocation6 [shape = 'u8[131072]{0}', space=vmem, size = 0x20000, scoped, tag = 'input window, operand 2, single buffered']
    %11 = vsyncpa [#allocation3], 0
    %12 = vsyncpa [#allocation5], 0
    // Predicated region
    $region2: #{qnet_apply.1} parent=1 // pred_check
      _
    $region3: #{qnet_apply.1} parent=1 // pred_check_branch
      %14 = sbr.rel (0) target = $region5
    $region4: #{qnet_apply.1} parent=1 // pred_region
      %s16 = ssub.s32 128, 128
      %17 = vsyncadd [#allocation3], %s16
      %s19 = sshll.u32 [#allocation2], 4
      %s20 = int_to_ptr.vmem [resolvable:$true] %s19
      %22 = dma.hbm_to_vmem [thread:$0]  %s0, 128, %s20, [#allocation3]
    $region5: #{qnet_apply.1} parent=1 // pred_fallthru
      _
    // Predicated region
    $region6: #{qnet_apply.1} parent=1 // pred_check
      _
    $region7: #{qnet_apply.1} parent=1 // pred_check_branch
      %24 = sbr.rel (0) target = $region9
    $region8: #{qnet_apply.1} parent=1 // pred_region
      %s26 = ssub.s32 256, 256
      %27 = vsyncadd [#allocation5], %s26
      %s28 = sshll.u32 [#allocation4], 4
      %s29 = int_to_ptr.vmem [resolvable:$true] %s28
      %34 = dma.hbm_to_vmem [thread:$0]  %s1, 256, %s29, [#allocation5], 128, 128, 8
    $region9: #{qnet_apply.1} parent=1 // pred_fallthru
      _
    // Predicated region
    $region10: #{qnet_apply.1} parent=1 // pred_check
      _
    $region11: #{qnet_apply.1} parent=1 // pred_check_branch
      %36 = sbr.rel (0) target = $region13
    $region12: #{qnet_apply.1} parent=1 // pred_region
      %s38 = ssub.s32 4096, 4096
      %39 = vsyncadd [#allocation5], %s38
      %s40 = sshll.u32 [#allocation6], 4
      %s41 = int_to_ptr.vmem [resolvable:$true] %s40
      %46 = dma.hbm_to_vmem [thread:$0]  %s2, 4096, %s41, [#allocation5], 128, 128, 8
    $region13: #{qnet_apply.1} parent=1 // pred_fallthru
      _
    // Predicated region
    $region14: #{qnet_apply.1} parent=1 // pred_check
      _
    $region15: #{qnet_apply.1} parent=1 // pred_check_branch
      %48 = sbr.rel (0) target = $region17
    $region16: #{qnet_apply.1} parent=1 // pred_region
      _
    $region17: #{qnet_apply.1} parent=1 // pred_fallthru
      _
    // Predicated region
    $region18: #{qnet_apply.1} parent=1 // pred_check
      _
    $region19: #{qnet_apply.1} parent=1 // pred_check_branch
      %50 = sbr.rel (0) target = $region21
    $region20: #{qnet_apply.1} parent=1 // pred_region
      %51 = dma.done [#allocation3], 128
    $region21: #{qnet_apply.1} parent=1 // pred_fallthru
      _
    // Predicated region
    $region22: #{qnet_apply.1} parent=1 // pred_check
      _
    $region23: #{qnet_apply.1} parent=1 // pred_check_branch
      %53 = sbr.rel (0) target = $region25
    $region24: #{qnet_apply.1} parent=1 // pred_region
      %54 = dma.done [#allocation5], 256
    $region25: #{qnet_apply.1} parent=1 // pred_fallthru
      _
    // Predicated region
    $region26: #{qnet_apply.1} parent=1 // pred_check
      _
    $region27: #{qnet_apply.1} parent=1 // pred_check_branch
      %56 = sbr.rel (0) target = $region29
    $region28: #{qnet_apply.1} parent=1 // pred_region
      %57 = dma.done [#allocation5], 4096
    $region29: #{qnet_apply.1} parent=1 // pred_fallthru
      _
    %v58 = vld [vmem:[#allocation2] sm:$0xff]
    %v59 = vld [vmem:[#allocation4] sm:$0xff]
    %v60 = vld [vmem:[#allocation4 + $0x8] sm:$0xff]
    %v61 = vld [vmem:[%s3] sm:$0x1]
    %v63 = vlaneseq
    %v64 = vshrl.u32 %v63, 7
    %v65 = vsub.s32 0, %v64
    %v66 = vrot.slane %v61, %v65
    %vm68 = vcmask 130048
    %v70 = vsel %vm68, %v58, 0
    %72 = vmatprep.subr.mxu0 0.0
    %73 = vmatpush1.msra.mxu0 %v59
    %74 = vmatprep.subr.mxu0 0.0
    %75 = vmatpush1.msra.mxu0 %v60
    %76 = vmatprep.subr.mxu0 0.0
    %77 = vmatpush1.msra.mxu0 0.0
    %78 = vmatprep.subr.mxu0 0.0
    %79 = vmatpush1.msra.mxu0 0.0
    %80 = vmatprep.subr.mxu0 0.0
    %81 = vmatpush1.msra.mxu0 0.0
    %82 = vmatprep.subr.mxu0 0.0
    %83 = vmatpush1.msra.mxu0 0.0
    %84 = vmatprep.subr.mxu0 0.0
    %85 = vmatpush1.msra.mxu0 0.0
    %86 = vmatprep.subr.mxu0 0.0
    %87 = vmatpush1.msra.mxu0 0.0
    %88 = vmatprep.subr.mxu0 0.0
    %89 = vmatpush1.msra.mxu0 0.0
    %90 = vmatprep.subr.mxu0 0.0
    %91 = vmatpush1.msra.mxu0 0.0
    %92 = vmatprep.subr.mxu0 0.0
    %93 = vmatpush1.msra.mxu0 0.0
    %94 = vmatprep.subr.mxu0 0.0
    %95 = vmatpush1.msra.mxu0 0.0
    %96 = vmatprep.subr.mxu0 0.0
    %97 = vmatpush1.msra.mxu0 0.0
    %98 = vmatprep.subr.mxu0 0.0
    %99 = vmatpush1.msra.mxu0 0.0
    %100 = vmatprep.subr.mxu0 0.0
    %101 = vmatpush1.msra.mxu0 0.0
    %102 = vmatprep.subr.mxu0 0.0
    %103 = vmatpush1.msra.mxu0 0.0
    %104 = vmatprep.subr.mxu0 0.0
    %105 = vmatpush1.msra.mxu0 0.0
    %106 = vmatprep.subr.mxu0 0.0
    %107 = vmatpush1.msra.mxu0 0.0
    %108 = vmatprep.subr.mxu0 0.0
    %109 = vmatpush1.msra.mxu0 0.0
    %110 = vmatprep.subr.mxu0 0.0
    %111 = vmatpush1.msra.mxu0 0.0
    %112 = vmatprep.subr.mxu0 0.0
    %113 = vmatpush1.msra.mxu0 0.0
    %114 = vmatprep.subr.mxu0 0.0
    %115 = vmatpush1.msra.mxu0 0.0
    %116 = vmatprep.subr.mxu0 0.0
    %117 = vmatpush1.msra.mxu0 0.0
    %118 = vmatprep.subr.mxu0 0.0
    %119 = vmatpush1.msra.mxu0 0.0
    %120 = vmatprep.subr.mxu0 0.0
    %121 = vmatpush1.msra.mxu0 0.0
    %122 = vmatprep.subr.mxu0 0.0
    %123 = vmatpush1.msra.mxu0 0.0
    %124 = vmatprep.subr.mxu0 0.0
    %125 = vmatpush1.msra.mxu0 0.0
    %126 = vmatprep.subr.mxu0 0.0
    %127 = vmatpush1.msra.mxu0 0.0
    %128 = vmatprep.subr.mxu0 0.0
    %129 = vmatpush1.msra.mxu0 0.0
    %130 = vmatprep.subr.mxu0 0.0
    %131 = vmatpush1.msra.mxu0 0.0
    %132 = vmatprep.subr.mxu0 0.0
    %133 = vmatpush1.msra.mxu0 0.0
    %134 = vmatprep.subr.mxu0 0.0
    %135 = vmatpush1.msra.mxu0 0.0
    %136 = vmatprep.mubr.f32.mxu0 0.0
    %137 = vmatmul.mubr.f32.gmra.mrb[0].mxu0 %v70
    %v138 = vpop.f32.mrb[0].mxu0
    %v139 = vadd.f32 %v66, %v138
    %v140 = vpop.f32.mrb[0].mxu0
    %141 = vdwg.mxu0
    %v142 = vmax.f32 %v139, 0.0
    %v143 = vld [vmem:[#allocation6] sm:$0xff]
    %v144 = vld [vmem:[#allocation6 + $0x8] sm:$0xff]
    %v145 = vld [vmem:[#allocation6 + $0x10] sm:$0xff]
    %v146 = vld [vmem:[#allocation6 + $0x18] sm:$0xff]
    %v147 = vld [vmem:[#allocation6 + $0x20] sm:$0xff]
    %v148 = vld [vmem:[#allocation6 + $0x28] sm:$0xff]
    %v149 = vld [vmem:[#allocation6 + $0x30] sm:$0xff]
    %v150 = vld [vmem:[#allocation6 + $0x38] sm:$0xff]
    %v151 = vld [vmem:[#allocation6 + $0x40] sm:$0xff]
    %v152 = vld [vmem:[#allocation6 + $0x48] sm:$0xff]
    %v153 = vld [vmem:[#allocation6 + $0x50] sm:$0xff]
    %v154 = vld [vmem:[#allocation6 + $0x58] sm:$0xff]
    %v155 = vld [vmem:[#allocation6 + $0x60] sm:$0xff]
    %v156 = vld [vmem:[#allocation6 + $0x68] sm:$0xff]
    %v157 = vld [vmem:[#allocation6 + $0x70] sm:$0xff]
    %v158 = vld [vmem:[#allocation6 + $0x78] sm:$0xff]
    %s159 = scalar_lea.vmem %s3, 1
    %v160 = vld [vmem:[%s159] sm:$0x1]
    %v162 = vlaneseq
    %v163 = vshrl.u32 %v162, 7
    %v164 = vsub.s32 0, %v163
    %v165 = vrot.slane %v160, %v164
    %167 = vmatprep.subr.mxu0 0.0
    %168 = vmatpush1.msra.mxu0 %v143
    %169 = vmatprep.subr.mxu0 0.0
    %170 = vmatpush1.msra.mxu0 %v144
    %171 = vmatprep.subr.mxu0 0.0
    %172 = vmatpush1.msra.mxu0 %v145
    %173 = vmatprep.subr.mxu0 0.0
    %174 = vmatpush1.msra.mxu0 %v146
    %175 = vmatprep.subr.mxu0 0.0
    %176 = vmatpush1.msra.mxu0 %v147
    %177 = vmatprep.subr.mxu0 0.0
    %178 = vmatpush1.msra.mxu0 %v148
    %179 = vmatprep.subr.mxu0 0.0
    %180 = vmatpush1.msra.mxu0 %v149
    %181 = vmatprep.subr.mxu0 0.0
    %182 = vmatpush1.msra.mxu0 %v150
    %183 = vmatprep.subr.mxu0 0.0
    %184 = vmatpush1.msra.mxu0 %v151
    %185 = vmatprep.subr.mxu0 0.0
    %186 = vmatpush1.msra.mxu0 %v152
    %187 = vmatprep.subr.mxu0 0.0
    %188 = vmatpush1.msra.mxu0 %v153
    %189 = vmatprep.subr.mxu0 0.0
    %190 = vmatpush1.msra.mxu0 %v154
    %191 = vmatprep.subr.mxu0 0.0
    %192 = vmatpush1.msra.mxu0 %v155
    %193 = vmatprep.subr.mxu0 0.0
    %194 = vmatpush1.msra.mxu0 %v156
    %195 = vmatprep.subr.mxu0 0.0
    %196 = vmatpush1.msra.mxu0 %v157
    %197 = vmatprep.subr.mxu0 0.0
    %198 = vmatpush1.msra.mxu0 %v158
    %199 = vmatprep.subr.mxu0 0.0
    %200 = vmatpush1.msra.mxu0 0.0
    %201 = vmatprep.subr.mxu0 0.0
    %202 = vmatpush1.msra.mxu0 0.0
    %203 = vmatprep.subr.mxu0 0.0
    %204 = vmatpush1.msra.mxu0 0.0
    %205 = vmatprep.subr.mxu0 0.0
    %206 = vmatpush1.msra.mxu0 0.0
    %207 = vmatprep.subr.mxu0 0.0
    %208 = vmatpush1.msra.mxu0 0.0
    %209 = vmatprep.subr.mxu0 0.0
    %210 = vmatpush1.msra.mxu0 0.0
    %211 = vmatprep.subr.mxu0 0.0
    %212 = vmatpush1.msra.mxu0 0.0
    %213 = vmatprep.subr.mxu0 0.0
    %214 = vmatpush1.msra.mxu0 0.0
    %215 = vmatprep.subr.mxu0 0.0
    %216 = vmatpush1.msra.mxu0 0.0
    %217 = vmatprep.subr.mxu0 0.0
    %218 = vmatpush1.msra.mxu0 0.0
    %219 = vmatprep.subr.mxu0 0.0
    %220 = vmatpush1.msra.mxu0 0.0
    %221 = vmatprep.subr.mxu0 0.0
    %222 = vmatpush1.msra.mxu0 0.0
    %223 = vmatprep.subr.mxu0 0.0
    %224 = vmatpush1.msra.mxu0 0.0
    %225 = vmatprep.subr.mxu0 0.0
    %226 = vmatpush1.msra.mxu0 0.0
    %227 = vmatprep.subr.mxu0 0.0
    %228 = vmatpush1.msra.mxu0 0.0
    %229 = vmatprep.subr.mxu0 0.0
    %230 = vmatpush1.msra.mxu0 0.0
    %231 = vmatprep.mubr.f32.mxu0 0.0
    %232 = vmatmul.mubr.f32.gmra.mrb[0].mxu0 %v142
    %v233 = vpop.f32.mrb[0].mxu0
    %v234 = vadd.f32 %v165, %v233
    %v235 = vpop.f32.mrb[0].mxu0
    %236 = vdwg.mxu0
    %v237 = vmax.f32 %v234, 0.0
    %s238 = scalar_lea.vmem [#allocation6], 128
    %v239 = vld [vmem:[%s238] sm:$0xff]
    %v240 = vld [vmem:[%s238 + $0x8] sm:$0xff]
    %v241 = vld [vmem:[%s238 + $0x10] sm:$0xff]
    %v242 = vld [vmem:[%s238 + $0x18] sm:$0xff]
    %v243 = vld [vmem:[%s238 + $0x20] sm:$0xff]
    %v244 = vld [vmem:[%s238 + $0x28] sm:$0xff]
    %v245 = vld [vmem:[%s238 + $0x30] sm:$0xff]
    %v246 = vld [vmem:[%s238 + $0x38] sm:$0xff]
    %v247 = vld [vmem:[%s238 + $0x40] sm:$0xff]
    %v248 = vld [vmem:[%s238 + $0x48] sm:$0xff]
    %v249 = vld [vmem:[%s238 + $0x50] sm:$0xff]
    %v250 = vld [vmem:[%s238 + $0x58] sm:$0xff]
    %v251 = vld [vmem:[%s238 + $0x60] sm:$0xff]
    %v252 = vld [vmem:[%s238 + $0x68] sm:$0xff]
    %v253 = vld [vmem:[%s238 + $0x70] sm:$0xff]
    %v254 = vld [vmem:[%s238 + $0x78] sm:$0xff]
    %s255 = scalar_lea.vmem %s3, 2
    %v256 = vld [vmem:[%s255] sm:$0x1]
    %v258 = vlaneseq
    %v259 = vshrl.u32 %v258, 7
    %v260 = vsub.s32 0, %v259
    %v261 = vrot.slane %v256, %v260
    %263 = vmatprep.subr.mxu0 0.0
    %264 = vmatpush1.msra.mxu0 %v239
    %265 = vmatprep.subr.mxu0 0.0
    %266 = vmatpush1.msra.mxu0 %v240
    %267 = vmatprep.subr.mxu0 0.0
    %268 = vmatpush1.msra.mxu0 %v241
    %269 = vmatprep.subr.mxu0 0.0
    %270 = vmatpush1.msra.mxu0 %v242
    %271 = vmatprep.subr.mxu0 0.0
    %272 = vmatpush1.msra.mxu0 %v243
    %273 = vmatprep.subr.mxu0 0.0
    %274 = vmatpush1.msra.mxu0 %v244
    %275 = vmatprep.subr.mxu0 0.0
    %276 = vmatpush1.msra.mxu0 %v245
    %277 = vmatprep.subr.mxu0 0.0
    %278 = vmatpush1.msra.mxu0 %v246
    %279 = vmatprep.subr.mxu0 0.0
    %280 = vmatpush1.msra.mxu0 %v247
    %281 = vmatprep.subr.mxu0 0.0
    %282 = vmatpush1.msra.mxu0 %v248
    %283 = vmatprep.subr.mxu0 0.0
    %284 = vmatpush1.msra.mxu0 %v249
    %285 = vmatprep.subr.mxu0 0.0
    %286 = vmatpush1.msra.mxu0 %v250
    %287 = vmatprep.subr.mxu0 0.0
    %288 = vmatpush1.msra.mxu0 %v251
    %289 = vmatprep.subr.mxu0 0.0
    %290 = vmatpush1.msra.mxu0 %v252
    %291 = vmatprep.subr.mxu0 0.0
    %292 = vmatpush1.msra.mxu0 %v253
    %293 = vmatprep.subr.mxu0 0.0
    %294 = vmatpush1.msra.mxu0 %v254
    %295 = vmatprep.subr.mxu0 0.0
    %296 = vmatpush1.msra.mxu0 0.0
    %297 = vmatprep.subr.mxu0 0.0
    %298 = vmatpush1.msra.mxu0 0.0
    %299 = vmatprep.subr.mxu0 0.0
    %300 = vmatpush1.msra.mxu0 0.0
    %301 = vmatprep.subr.mxu0 0.0
    %302 = vmatpush1.msra.mxu0 0.0
    %303 = vmatprep.subr.mxu0 0.0
    %304 = vmatpush1.msra.mxu0 0.0
    %305 = vmatprep.subr.mxu0 0.0
    %306 = vmatpush1.msra.mxu0 0.0
    %307 = vmatprep.subr.mxu0 0.0
    %308 = vmatpush1.msra.mxu0 0.0
    %309 = vmatprep.subr.mxu0 0.0
    %310 = vmatpush1.msra.mxu0 0.0
    %311 = vmatprep.subr.mxu0 0.0
    %312 = vmatpush1.msra.mxu0 0.0
    %313 = vmatprep.subr.mxu0 0.0
    %314 = vmatpush1.msra.mxu0 0.0
    %315 = vmatprep.subr.mxu0 0.0
    %316 = vmatpush1.msra.mxu0 0.0
    %317 = vmatprep.subr.mxu0 0.0
    %318 = vmatpush1.msra.mxu0 0.0
    %319 = vmatprep.subr.mxu0 0.0
    %320 = vmatpush1.msra.mxu0 0.0
    %321 = vmatprep.subr.mxu0 0.0
    %322 = vmatpush1.msra.mxu0 0.0
    %323 = vmatprep.subr.mxu0 0.0
    %324 = vmatpush1.msra.mxu0 0.0
    %325 = vmatprep.subr.mxu0 0.0
    %326 = vmatpush1.msra.mxu0 0.0
    %327 = vmatprep.mubr.f32.mxu0 0.0
    %328 = vmatmul.mubr.f32.gmra.mrb[0].mxu0 %v237
    %v329 = vpop.f32.mrb[0].mxu0
    %v330 = vadd.f32 %v261, %v329
    %v331 = vpop.f32.mrb[0].mxu0
    %332 = vdwg.mxu0
    %vm333 = vcmask 31744
    %334 = vst.msk [vmem:[%s4] sm:$0xff] %vm333, %v330
    %v335 = vsel %vm333, %v330, -inf
    %336 = vmax.xlane.f32.xlu0 %v335
    %v337 = vpop.xlane.xlu0 %336
    %v338 = vlaneseq
    %v339 = vand.u32 %v338, 127
    %vm340 = vcmp.eq.f32.partialorder %v330, %v337
    %v341 = vsel %vm340, %v339, 4
    %v342 = vsel %vm333, %v341, 2147483647
    %v343 = vand.u32 %v342, 65535
    %v344 = vshra.s32 %v342, 16
    %v345 = vcvt.s32.f32 %v343
    %v346 = vcvt.s32.f32 %v344
    %347 = vmin.xlane.f32.xlu0 %v346
    %v348 = vpop.xlane.xlu0 %347
    %vm349 = vcmp.eq.f32.partialorder %v346, %v348
    %v350 = vsel %vm349, %v345, inf
    %351 = vmin.xlane.f32.xlu0 %v350
    %v352 = vpop.xlane.xlu0 %351
    %v353 = vcvt.f32.s32 %v352
    %v354 = vcvt.f32.s32 %v348
    %v355 = vshll.u32 %v354, 16
    %v356 = vadd.s32 %v355, %v353
    %vm357 = vcmask 7168
    %358 = vst.msk [vmem:[%s5] sm:$0xff] %vm357, %v356
    // Predicated region
    $region30: #{qnet_apply.1} parent=1 // pred_check
      _
    $region31: #{qnet_apply.1} parent=1 // pred_check_branch
      %360 = sbr.rel (0) target = $region33
    $region32: #{qnet_apply.1} parent=1 // pred_region
      _
    $region33: #{qnet_apply.1} parent=1 // pred_fallthru
      _
    // Predicated region
    $region34: #{qnet_apply.1} parent=1 // pred_check
      _
    $region35: #{qnet_apply.1} parent=1 // pred_check_branch
      %362 = sbr.rel (0) target = $region37
    $region36: #{qnet_apply.1} parent=1 // pred_region
      _
    $region37: #{qnet_apply.1} parent=1 // pred_fallthru
      _
    // Predicated region
    $region38: #{qnet_apply.1} parent=1 // pred_check
      _
    $region39: #{qnet_apply.1} parent=1 // pred_check_branch
      %364 = sbr.rel (0) target = $region41
    $region40: #{qnet_apply.1} parent=1 // pred_region
      _
    $region41: #{qnet_apply.1} parent=1 // pred_fallthru
      _
    // Predicated region
    $region42: #{qnet_apply.1} parent=1 // pred_check
      _
    $region43: #{qnet_apply.1} parent=1 // pred_check_branch
      %366 = sbr.rel (0) target = $region45
    $region44: #{qnet_apply.1} parent=1 // pred_region
      _
    $region45: #{qnet_apply.1} parent=1 // pred_fallthru
      _
    %367 = vsyncpa [#allocation3], 1
    %368 = vsyncpa [#allocation5], 1

</llo_original>
